<compile_context>
chip_gen: v7x
topology: tpu7x:2x2x1
jax: 0.10.0
libtpu: 0.0.40
codegen_flags: <defaults>
</compile_context>

<pallas_src>
import jax
import jax.numpy as jnp
from jax.experimental import pallas as pl
from jax.experimental.pallas import tpu as pltpu


def identity(x: jax.Array) -> jax.Array:
    """Optimal Identity: metadata-only, no kernel launch, no HBM traffic."""
    return x


def _copy_kernel(x_ref, o_ref):
    o_ref[...] = x_ref[...]


@jax.jit
def identity_pallas_copy(x: jax.Array) -> jax.Array:
    """Pallas TPU copy kernel — only for when a distinct materialized copy is needed."""
    orig_shape = x.shape
    total = x.size
    if total == 0:
        return x

    LANES = 512  # lane-dense width (4 x 128 lanes) -> unmasked full-width vst
    itemsize = jnp.dtype(x.dtype).itemsize
    sublane = {4: 8, 2: 16, 1: 32}.get(itemsize, 8)

    flat = x.reshape(-1)
    # Only pad the tail up to the next 512-lane row (< 512 elems, exact for most
    # shapes; fused under jit).  No tile-multiple padding any more.
    rem = total % LANES
    padded_total = total + (LANES - rem if rem else 0)
    if padded_total != total:
        flat = jnp.pad(flat, (0, padded_total - total))
    M = padded_total // LANES
    x2 = flat.reshape(M, LANES)

    # ~8 MiB tiles: amortizes the ~0.35 us per-grid-step overhead; 2 in-bufs +
    # 2 out-bufs = 32 MiB, inside the 48 MiB scoped limit on every generation.
    max_tile_bytes = 8 * 1024 * 1024
    tm_cap = max(sublane, (max_tile_bytes // (LANES * itemsize)) // sublane * sublane)

    if M <= tm_cap:
        if M * LANES * itemsize >= (1 << 20) and M >= 2 * sublane:
            # Mid-sized array: force >=2 grid steps so ("parallel",) can shard
            # the copy across v7x's two TensorCores.
            tm = pl.cdiv(pl.cdiv(M, 2), sublane) * sublane
        else:
            # Tiny array: single block equal to the full array extent.
            tm = M
    else:
        tm = tm_cap

    grid = (pl.cdiv(M, tm),)  # ragged last block handled by Pallas masking

    out2 = pl.pallas_call(
        _copy_kernel,
        out_shape=jax.ShapeDtypeStruct((M, LANES), x.dtype),
        grid=grid,
        in_specs=[pl.BlockSpec((tm, LANES), lambda i: (i, 0))],
        out_specs=pl.BlockSpec((tm, LANES), lambda i: (i, 0)),
        compiler_params=pltpu.CompilerParams(
            dimension_semantics=("parallel",),
            vmem_limit_bytes=48 * 1024 * 1024,
        ),
    )(x2)

    # Tail slice + reshape are metadata-only under jit.
    return out2.reshape(-1)[:total].reshape(orig_shape)


if __name__ == "__main__":
    key = jax.random.PRNGKey(0)
    # Small NCHW-style input consistent with typical usage of nn.Identity.
    x = jax.random.normal(key, (2, 4, 16, 16), dtype=jnp.float32)

    # Preferred path: zero-cost identity (matches Identity.forward exactly).
    y = identity(x)
    jax.block_until_ready(y)
    assert y.shape == x.shape and y.dtype == x.dtype
    assert bool(jnp.all(y == x))

    # Exercise the Pallas copy kernel (used only when a distinct buffer is needed).
    y2 = identity_pallas_copy(x)
    jax.block_until_ready(y2)
    assert y2.shape == x.shape and y2.dtype == x.dtype
    assert bool(jnp.all(y2 == x))

    print("KERNEL_OK")
</pallas_src>

<mosaic_0001>
module attributes {stable_mosaic.version = 11 : i64} {
  func.func @_copy_kernel(%arg0: i32, %arg1: memref<4x512xf32, #tpu.memory_space<vmem>>, %arg2: memref<4x512xf32, #tpu.memory_space<vmem>>) attributes {dimension_semantics = [#tpu.dimension_semantics<parallel>], iteration_bounds = array<i64: 1>, scalar_prefetch = 0 : i64, scratch_operands = 0 : i64, tpu.core_type = #tpu.core_type<tc>, window_params = [{transform_indices = @transform_0, window_bounds = array<i64: 4, 512>}, {transform_indices = @transform_1, window_bounds = array<i64: 4, 512>}]} {
    %c0 = arith.constant 0 : index
    %c0_0 = arith.constant 0 : index
    %0 = vector.load %arg1[%c0, %c0_0] : memref<4x512xf32, #tpu.memory_space<vmem>>, vector<4x512xf32>
    %c0_1 = arith.constant 0 : index
    %c0_2 = arith.constant 0 : index
    %1 = vector.load %arg2[%c0_1, %c0_2] : memref<4x512xf32, #tpu.memory_space<vmem>>, vector<4x512xf32>
    tpu.vector_store %arg2[%c0_1, %c0_2], %0 {strides = array<i32>} : memref<4x512xf32, #tpu.memory_space<vmem>>, vector<4x512xf32>,
    return
  }
  func.func @transform_0(%arg0: i32) -> (i32, i32) {
    %c0_i32 = arith.constant 0 : i32
    %c0_i32_0 = arith.constant 0 : i32
    return %arg0, %c0_i32 : i32, i32
  }
  func.func @transform_1(%arg0: i32) -> (i32, i32) {
    %c0_i32 = arith.constant 0 : i32
    %c0_i32_0 = arith.constant 0 : i32
    return %arg0, %c0_i32 : i32, i32
  }
}

</mosaic_0001>

<llo_original>
// kernel: identity_pallas_copy.1
$region0: #{identity_pallas_copy.1}
  #allocation0 [shape = 'u32[]', space=smem, size = 0x4, offset = 0x4, fixed_abs, tag = 'smem constant byte address 0x4 - core index']
  #allocation1 [shape = 'u32[144,128]{1,0:T(1,128)}', space=vmem, size = 0x12000, scoped, tag = 'internal scratch']
  %s0 = inlined_call_operand.vmem [shape: f32[4,512], index: 0, kind: input, shape index: {}]
  %s1 = inlined_call_operand.vmem [shape: f32[4,512], index: 1, kind: output, shape index: {}]
  %s2 = sld [smem:[#allocation0]]
  $region14: #{identity_pallas_copy.1} parent=0
    _
  %s4 = ssub.s32 1, %s2
  %s5 = scalar_select 0, %s4, %s2
  // Predicated region
  $region2: #{identity_pallas_copy.1} parent=0 // pred_check
    _
  $region3: #{identity_pallas_copy.1} parent=0 // pred_check_branch
    %7 = sbr.rel (0) target = $region5
  $region4: #{identity_pallas_copy.1} parent=0 // pred_region
    _
  $region5: #{identity_pallas_copy.1} parent=0 // pred_fallthru
    _
  %v8 = vld [vmem:[%s0] sm:$0xff]
  %v9 = vld [vmem:[%s0 + $0x8] sm:$0xff]
  %10 = vst [vmem:[%s1] sm:$0xff] %v8
  %11 = vst [vmem:[%s1 + $0x8] sm:$0xff] %v9
  // Predicated region
  $region6: #{identity_pallas_copy.1} parent=0 // pred_check
    _
  $region7: #{identity_pallas_copy.1} parent=0 // pred_check_branch
    %13 = sbr.rel (0) target = $region9
  $region8: #{identity_pallas_copy.1} parent=0 // pred_region
    _
  $region9: #{identity_pallas_copy.1} parent=0 // pred_fallthru
    _
  // Predicated region
  $region10: #{identity_pallas_copy.1} parent=0 // pred_check
    _
  $region11: #{identity_pallas_copy.1} parent=0 // pred_check_branch
    %15 = sbr.rel (0) target = $region13
  $region12: #{identity_pallas_copy.1} parent=0 // pred_region
    _
  $region13: #{identity_pallas_copy.1} parent=0 // pred_fallthru
    _

</llo_original>
